<compile_context>
chip_gen: v5e
topology: v5e:2x2
jax: 0.10.0
libtpu: 0.0.40
codegen_flags: <defaults>
</compile_context>

<pallas_src>
import jax
import jax.numpy as jnp
from jax.experimental import pallas as pl
from jax.experimental.pallas import tpu as pltpu

_MAX_BATCH_TILE = 16                       # unrolled per-image loop cap
_VMEM_FOOTPRINT_BUDGET = 36 * 1024 * 1024  # resident-footprint budget per step
_BASE_VMEM_LIMIT = 48 * 1024 * 1024        # safe on v5e/v6e (128 MiB) & v7x (64 MiB)


def _gradient2d_kernel(x_ref, gx_ref, gy_ref):
    # x_ref: (bt, H, W) input slab; gx_ref/gy_ref: (bt, Ho, Wo) cropped outputs.
    bt, H, W = x_ref.shape
    Ho, Wo = gx_ref.shape[1], gx_ref.shape[2]
    # bt is static and small (<= _MAX_BATCH_TILE); fully unrolled per-image loop.
    for b in range(bt):
        x = x_ref[b].astype(jnp.float32)          # (H, W), f32 compute (v5e-safe)

        # Row shifts (sublane axis) via XLU rotates: roll(x, H-k, 0)[i] = x[i+k].
        # Wrap-around junk only lands in rows >= H-2, which are never stored.
        r1 = pltpu.roll(x, H - 1, axis=0)         # x[i+1, :]
        r2 = pltpu.roll(x, H - 2, axis=0)         # x[i+2, :]

        # Separable Sobel: vertical [1,2,1] smooth and vertical [-1,0,1] diff.
        s = x + (r1 + r1) + r2                    # *2 expressed as an add
        d = r2 - x

        # Column shifts (lane axis); junk only in cols >= W-2, never stored.
        gx = pltpu.roll(s, W - 2, axis=1) - s     # s[:, j+2] - s[:, j]
        d1 = pltpu.roll(d, W - 1, axis=1)         # d[:, j+1]
        d2 = pltpu.roll(d, W - 2, axis=1)         # d[:, j+2]
        gy = d + (d1 + d1) + d2

        # Crop folded into the kernel: store only the VALID region.
        gx_ref[b] = gx[:Ho, :Wo].astype(gx_ref.dtype)
        gy_ref[b] = gy[:Ho, :Wo].astype(gy_ref.dtype)


def _estimate_vmem_bytes(bt, h, w, itemsize):
    """Resident footprint of one grid step: pipelined buffers + f32 temps."""
    in_slab = bt * h * w * itemsize
    out_slab = bt * (h - 2) * (w - 2) * itemsize
    pipeline = 2 * in_slab + 2 * 2 * out_slab     # dbl-buffered in + 2 dbl-buffered outs
    temps = 6 * bt * h * w * 4                    # conservative f32 working values
    return pipeline + temps


def _pick_batch_tile(n, h, w, itemsize):
    """Largest divisor of n that (a) leaves >= 2 grid steps when n >= 2 (v7x
    megacore + DMA/compute overlap), (b) stays small enough to unroll, and
    (c) fits the resident VMEM footprint budget."""
    cap = max(1, n // 2) if n >= 2 else 1
    cap = min(cap, _MAX_BATCH_TILE)
    for cand in range(cap, 0, -1):
        if n % cand:
            continue
        if _estimate_vmem_bytes(cand, h, w, itemsize) <= _VMEM_FOOTPRINT_BUDGET:
            return cand
    return 1


@jax.jit
def gradient2d(x):
    """x: (N, 1, H, W). Returns (grad_x, grad_y), each (N, 1, H-2, W-2)."""
    N, C, H, W = x.shape
    assert C == 1, "Gradient2D conv weights have in_channels=1"
    assert H >= 3 and W >= 3
    Ho, Wo = H - 2, W - 2
    out_dtype = x.dtype
    itemsize = jnp.dtype(x.dtype).itemsize

    bt = _pick_batch_tile(N, H, W, itemsize)
    est = _estimate_vmem_bytes(bt, H, W, itemsize)
    # 48 MiB default leaves headroom on v7x (64 MiB physical); only grow it if a
    # single image doesn't fit the budget (until the halo H-tiling TODO lands).
    vmem_limit = int(max(_BASE_VMEM_LIMIT, est + (8 << 20)))

    x3 = x.reshape(N, H, W)                       # drop the channel dim (C == 1)

    in_spec = pl.BlockSpec((bt, H, W), lambda i: (i, 0, 0))
    out_spec = pl.BlockSpec((bt, Ho, Wo), lambda i: (i, 0, 0))

    gx, gy = pl.pallas_call(
        _gradient2d_kernel,
        out_shape=(
            jax.ShapeDtypeStruct((N, Ho, Wo), out_dtype),
            jax.ShapeDtypeStruct((N, Ho, Wo), out_dtype),
        ),
        grid_spec=pltpu.PrefetchScalarGridSpec(
            num_scalar_prefetch=0,
            grid=(N // bt,),
            in_specs=[in_spec],
            out_specs=[out_spec, out_spec],
        ),
        compiler_params=pltpu.CompilerParams(
            dimension_semantics=("parallel",),
            vmem_limit_bytes=vmem_limit,
        ),
    )(x3)

    # Reshape is metadata-only (adds the size-1 channel dim back); no crop here.
    return gx.reshape(N, 1, Ho, Wo), gy.reshape(N, 1, Ho, Wo)


def _reference(x):
    """Pure-JAX reference (lax.conv, NCHW) for a correctness check."""
    kx = jnp.array([[-1.0, 0.0, 1.0], [-2.0, 0.0, 2.0], [-1.0, 0.0, 1.0]],
                   dtype=jnp.float32).reshape(1, 1, 3, 3)
    ky = jnp.array([[-1.0, -2.0, -1.0], [0.0, 0.0, 0.0], [1.0, 2.0, 1.0]],
                   dtype=jnp.float32).reshape(1, 1, 3, 3)
    gx = jax.lax.conv_general_dilated(x, kx, (1, 1), "VALID",
                                      dimension_numbers=("NCHW", "OIHW", "NCHW"))
    gy = jax.lax.conv_general_dilated(x, ky, (1, 1), "VALID",
                                      dimension_numbers=("NCHW", "OIHW", "NCHW"))
    return gx, gy


if __name__ == "__main__":
    key = jax.random.PRNGKey(0)
    # Small single-channel NCHW input (C=1 is required by the module's conv
    # weights); W=128 keeps the demo in the lane-aligned regime.
    x = jax.random.normal(key, (2, 1, 16, 128), dtype=jnp.float32)

    gx, gy = gradient2d(x)
    jax.block_until_ready((gx, gy))

    gx_ref, gy_ref = _reference(x)
    assert gx.shape == (2, 1, 14, 126) and gy.shape == (2, 1, 14, 126)
    assert jnp.allclose(gx, gx_ref, atol=1e-5, rtol=1e-5)
    assert jnp.allclose(gy, gy_ref, atol=1e-5, rtol=1e-5)

    print("KERNEL_OK")
</pallas_src>

<mosaic_0001>
module attributes {stable_mosaic.version = 11 : i64} {
  func.func @_gradient2d_kernel(%arg0: i32, %arg1: memref<1x16x128xf32, #tpu.memory_space<vmem>>, %arg2: memref<1x14x126xf32, #tpu.memory_space<vmem>>, %arg3: memref<1x14x126xf32, #tpu.memory_space<vmem>>) attributes {dimension_semantics = [#tpu.dimension_semantics<parallel>], iteration_bounds = array<i64: 2>, scalar_prefetch = 0 : i64, scratch_operands = 0 : i64, tpu.core_type = #tpu.core_type<tc>, window_params = [{transform_indices = @transform_0, window_bounds = array<i64: 1, 16, 128>}, {transform_indices = @transform_1, window_bounds = array<i64: 1, 14, 126>}, {transform_indices = @transform_2, window_bounds = array<i64: 1, 14, 126>}]} {
    %c0 = arith.constant 0 : index
    %c0_0 = arith.constant 0 : index
    %c0_1 = arith.constant 0 : index
    %0 = vector.load %arg1[%c0, %c0_0, %c0_1] : memref<1x16x128xf32, #tpu.memory_space<vmem>>, vector<1x16x128xf32>
    %1 = vector.shape_cast %0 : vector<1x16x128xf32> to vector<16x128xf32>
    %c15_i32 = arith.constant 15 : i32
    %2 = tpu.dynamic_rotate %1 by %c15_i32 dim 0 : vector<16x128xf32>, i32 -> vector<16x128xf32>
    %c14_i32 = arith.constant 14 : i32
    %3 = tpu.dynamic_rotate %1 by %c14_i32 dim 0 : vector<16x128xf32>, i32 -> vector<16x128xf32>
    %4 = arith.addf %2, %2 : vector<16x128xf32>
    %5 = arith.addf %1, %4 : vector<16x128xf32>
    %6 = arith.addf %5, %3 : vector<16x128xf32>
    %7 = arith.subf %3, %1 : vector<16x128xf32>
    %c126_i32 = arith.constant 126 : i32
    %8 = tpu.dynamic_rotate %6 by %c126_i32 dim 1 : vector<16x128xf32>, i32 -> vector<16x128xf32>
    %9 = arith.subf %8, %6 : vector<16x128xf32>
    %c127_i32 = arith.constant 127 : i32
    %10 = tpu.dynamic_rotate %7 by %c127_i32 dim 1 : vector<16x128xf32>, i32 -> vector<16x128xf32>
    %c126_i32_2 = arith.constant 126 : i32
    %11 = tpu.dynamic_rotate %7 by %c126_i32_2 dim 1 : vector<16x128xf32>, i32 -> vector<16x128xf32>
    %12 = arith.addf %10, %10 : vector<16x128xf32>
    %13 = arith.addf %7, %12 : vector<16x128xf32>
    %14 = arith.addf %13, %11 : vector<16x128xf32>
    %15 = vector.extract_strided_slice %9 {offsets = [0, 0], sizes = [14, 126], strides = [1, 1]} : vector<16x128xf32> to vector<14x126xf32>
    %c0_3 = arith.constant 0 : index
    %c0_4 = arith.constant 0 : index
    %c0_5 = arith.constant 0 : index
    %16 = vector.load %arg2[%c0_3, %c0_4, %c0_5] : memref<1x14x126xf32, #tpu.memory_space<vmem>>, vector<1x14x126xf32>
    %17 = vector.shape_cast %16 : vector<1x14x126xf32> to vector<14x126xf32>
    %18 = vector.shape_cast %15 : vector<14x126xf32> to vector<1x14x126xf32>
    tpu.vector_store %arg2[%c0_3, %c0_4, %c0_5], %18 {strides = array<i32>} : memref<1x14x126xf32, #tpu.memory_space<vmem>>, vector<1x14x126xf32>,
    %19 = vector.extract_strided_slice %14 {offsets = [0, 0], sizes = [14, 126], strides = [1, 1]} : vector<16x128xf32> to vector<14x126xf32>
    %c0_6 = arith.constant 0 : index
    %c0_7 = arith.constant 0 : index
    %c0_8 = arith.constant 0 : index
    %20 = vector.load %arg3[%c0_6, %c0_7, %c0_8] : memref<1x14x126xf32, #tpu.memory_space<vmem>>, vector<1x14x126xf32>
    %21 = vector.shape_cast %20 : vector<1x14x126xf32> to vector<14x126xf32>
    %22 = vector.shape_cast %19 : vector<14x126xf32> to vector<1x14x126xf32>
    tpu.vector_store %arg3[%c0_6, %c0_7, %c0_8], %22 {strides = array<i32>} : memref<1x14x126xf32, #tpu.memory_space<vmem>>, vector<1x14x126xf32>,
    return
  }
  func.func @transform_0(%arg0: i32) -> (i32, i32, i32) {
    %c0_i32 = arith.constant 0 : i32
    %c0_i32_0 = arith.constant 0 : i32
    %c0_i32_1 = arith.constant 0 : i32
    return %arg0, %c0_i32, %c0_i32_0 : i32, i32, i32
  }
  func.func @transform_1(%arg0: i32) -> (i32, i32, i32) {
    %c0_i32 = arith.constant 0 : i32
    %c0_i32_0 = arith.constant 0 : i32
    %c0_i32_1 = arith.constant 0 : i32
    return %arg0, %c0_i32, %c0_i32_0 : i32, i32, i32
  }
  func.func @transform_2(%arg0: i32) -> (i32, i32, i32) {
    %c0_i32 = arith.constant 0 : i32
    %c0_i32_0 = arith.constant 0 : i32
    %c0_i32_1 = arith.constant 0 : i32
    return %arg0, %c0_i32, %c0_i32_0 : i32, i32, i32
  }
}

</mosaic_0001>

<llo_original>
// kernel: gradient2d.1
$region0: #{gradient2d.1}
  #allocation0 [shape = 'u32[]', space=smem, size = 0x4, offset = 0x4, fixed_abs, tag = 'smem constant byte address 0x4 - core index']
  #allocation1 [shape = 'u32[72,128]{1,0:T(1,128)}', space=vmem, size = 0x9000, scoped, tag = 'internal scratch']
  %s0 = inlined_call_operand.hbm [shape: f32[2,16,128], index: 0, kind: input, shape index: {}]
  %s1 = inlined_call_operand.vmem [shape: f32[2,14,126], index: 1, kind: output, shape index: {0}]
  %s2 = inlined_call_operand.vmem [shape: f32[2,14,126], index: 2, kind: output, shape index: {1}]
  %3 = xla_tuple %s1, %s2
  %s4 = sld [smem:[#allocation0]]
  $region49: #{gradient2d.1} parent=0
    _
  %s6 = ssub.s32 1, %s4
  %s7 = scalar_select 0, %s6, %s4
  $region1: #{gradient2d.1} parent=0
    #allocation2 [shape = 'u8[16384]{0}', space=vmem, size = 0x4000, scoped, tag = 'input window, operand 0']
    #allocation3 [shape = 's32[2]{0}', space=sflag, size = 0x8, scoped, tag = 'scoped memory for gradient2d.1']
    %8 = vsyncpa [#allocation3], 0
    %s9 = scalar_lea.sflag [#allocation3], 1
    %10 = vsyncpa %s9, 0
    loop: start=0, step=1, limit=4
    $region2: #{gradient2d.1} parent=1 // loop_pre_header
      _
    $region3: #{gradient2d.1} parent=1 // loop_header
      %s12 = sphi 0, %s16
      %p13 = scmp.ge.s32.totalorder %s12, 4
      %s22 = sphi 0, %s24
      %s25 = sphi 0, %s22
      %s26 = sphi 0, %s25
      %s42 = sphi 0, %s26
      %s48 = sphi 0, %s50
      %s51 = sphi 0, %s48
      %s52 = sphi 0, %s51
      %s68 = sphi 0, %s52
      %s74 = sphi 0, %s76
      %s77 = sphi 0, %s74
      %s78 = sphi 0, %s77
      %s94 = sphi 0, %s78
    $region4: #{gradient2d.1} parent=1 // loop_header_branch
      %15 = sbr.rel (%p13) target = $region8
    $region5: #{gradient2d.1} parent=1 // loop_body
      %s17 = ssub.s32 %s12, 1
      %s18 = ssub.s32 %s12, 2
      %s19 = sadd.s32 %s12, 1
      %s20 = ssub.s32 %s12, %s19
      %p21 = scmp.eq.s32.totalorder %s20, 0
      %s23 = sadd.s32 %s22, 1
      %s24 = scalar_select %p21, %s22, %s23
      %p27 = pneg %p21
      %p28 = scmp.eq.s32.totalorder %s12, 1
      %p29 = por %p27, %p28
      %p30 = scmp.ne.s32.totalorder %s22, %s25
      %p31 = scmp.eq.s32.totalorder %s12, 0
      %p32 = por %p30, %p31
      %p33 = scmp.ne.s32.totalorder %s22, %s25
      %p34 = scmp.eq.s32.totalorder %s17, 1
      %p35 = por %p33, %p34
      %p36 = scmp.ne.s32.totalorder %s25, %s26
      %p37 = scmp.eq.s32.totalorder %s17, 0
      %p38 = por %p36, %p37
      %p39 = scmp.ne.s32.totalorder %s25, %s26
      %p40 = scmp.eq.s32.totalorder %s18, 1
      %p41 = por %p39, %p40
      %p43 = scmp.ne.s32.totalorder %s26, %s42
      %p44 = scmp.eq.s32.totalorder %s18, 0
      %p45 = por %p43, %p44
      %s46 = ssub.s32 %s12, %s19
      %p47 = scmp.eq.s32.totalorder %s46, 0
      %s49 = sadd.s32 %s48, 1
      %s50 = scalar_select %p47, %s48, %s49
      %p53 = pneg %p47
      %p54 = scmp.eq.s32.totalorder %s12, 1
      %p55 = por %p53, %p54
      %p56 = scmp.ne.s32.totalorder %s48, %s51
      %p57 = scmp.eq.s32.totalorder %s12, 0
      %p58 = por %p56, %p57
      %p59 = scmp.ne.s32.totalorder %s48, %s51
      %p60 = scmp.eq.s32.totalorder %s17, 1
      %p61 = por %p59, %p60
      %p62 = scmp.ne.s32.totalorder %s51, %s52
      %p63 = scmp.eq.s32.totalorder %s17, 0
      %p64 = por %p62, %p63
      %p65 = scmp.ne.s32.totalorder %s51, %s52
      %p66 = scmp.eq.s32.totalorder %s18, 1
      %p67 = por %p65, %p66
      %p69 = scmp.ne.s32.totalorder %s52, %s68
      %p70 = scmp.eq.s32.totalorder %s18, 0
      %p71 = por %p69, %p70
      %s72 = ssub.s32 %s12, %s19
      %p73 = scmp.eq.s32.totalorder %s72, 0
      %s75 = sadd.s32 %s74, 1
      %s76 = scalar_select %p73, %s74, %s75
      %p79 = pneg %p73
      %p80 = scmp.eq.s32.totalorder %s12, 1
      %p81 = por %p79, %p80
      %p82 = scmp.ne.s32.totalorder %s74, %s77
      %p83 = scmp.eq.s32.totalorder %s12, 0
      %p84 = por %p82, %p83
      %p85 = scmp.ne.s32.totalorder %s74, %s77
      %p86 = scmp.eq.s32.totalorder %s17, 1
      %p87 = por %p85, %p86
      %p88 = scmp.ne.s32.totalorder %s77, %s78
      %p89 = scmp.eq.s32.totalorder %s17, 0
      %p90 = por %p88, %p89
      %p91 = scmp.ne.s32.totalorder %s77, %s78
      %p92 = scmp.eq.s32.totalorder %s18, 1
      %p93 = por %p91, %p92
      %p95 = scmp.ne.s32.totalorder %s78, %s94
      %p96 = scmp.eq.s32.totalorder %s18, 0
      %p97 = por %p95, %p96
      %p98 = scmp.le.s32.totalorder 1, %s12
      %p99 = scmp.lt.s32.totalorder %s12, 3
      %p100 = pnand %p98, %p99
      %p101 = pneg %p100
      // Predicated region
      $region9: #{gradient2d.1} parent=5 // pred_check
        _
      $region10: #{gradient2d.1} parent=5 // pred_check_branch
        %103 = sbr.rel (%p100) target = $region12
      $region11: #{gradient2d.1} parent=5 // pred_region
        %s104 = ssub.s32 %s12, 1
      $region12: #{gradient2d.1} parent=5 // pred_fallthru
        _
      %p105 = scmp.lt.s32.totalorder %s12, 2
      // Predicated region
      $region13: #{gradient2d.1} parent=5 // pred_check
        %p106 = pneg %p105
      $region14: #{gradient2d.1} parent=5 // pred_check_branch
        %108 = sbr.rel (%p106) target = $region16
      $region15: #{gradient2d.1} parent=5 // pred_region
        // Predicated region
        $region17: #{gradient2d.1} parent=15 // pred_check
          %p109 = pneg %p32
        $region18: #{gradient2d.1} parent=15 // pred_check_branch
          %111 = sbr.rel (%p109) target = $region20
        $region19: #{gradient2d.1} parent=15 // pred_region
          %s112 = sand.u32 %s22, 1
          %s113 = scalar_lea.sflag [#allocation3], %s112
          %s114 = sand.u32 %s22, 1
          %s115 = smul.addr %s114, 16
          %s116 = scalar_lea.vmem [#allocation2], %s115
          %118 = vsyncadd %s113, 0
          %s119 = smul.addr %s12, 2
          %s120 = smul.addr %s119, 8
          %s121 = scalar_lea.hbm %s0, %s120
          %s122 = sshll.u32 %s121, 4
          %s123 = int_to_ptr.hbm [resolvable:$true] %s122
          %s124 = sshll.u32 %s116, 4
          %s125 = int_to_ptr.vmem [resolvable:$true] %s124
          %130 = dma.hbm_to_vmem [thread:$0]  %s123, 256, %s125, %s113, 128, 128, 8
        $region20: #{gradient2d.1} parent=15 // pred_fallthru
          _
      $region16: #{gradient2d.1} parent=5 // pred_fallthru
        _
      %p131 = scmp.le.s32.totalorder 1, %s12
      %p132 = scmp.lt.s32.totalorder %s12, 3
      %p133 = pnand %p131, %p132
      %p134 = pneg %p133
      // Predicated region
      $region21: #{gradient2d.1} parent=5 // pred_check
        _
      $region22: #{gradient2d.1} parent=5 // pred_check_branch
        %136 = sbr.rel (%p133) target = $region24
      $region23: #{gradient2d.1} parent=5 // pred_region
        %s137 = ssub.s32 %s12, 1
        %s138 = sand.u32 %s25, 1
        %s139 = scalar_lea.sflag [#allocation3], %s138
        %s140 = sand.u32 %s25, 1
        %s141 = smul.addr %s140, 16
        %s142 = scalar_lea.vmem [#allocation2], %s141
        // Predicated region
        $region25: #{gradient2d.1} parent=23 // pred_check
          %p143 = pneg %p38
        $region26: #{gradient2d.1} parent=23 // pred_check_branch
          %145 = sbr.rel (%p143) target = $region28
        $region27: #{gradient2d.1} parent=23 // pred_region
          %147 = dma.done %s139, 256
        $region28: #{gradient2d.1} parent=23 // pred_fallthru
          _
        %s148 = sand.u32 %s25, 1
        %s149 = scalar_lea.sflag [#allocation3], %s148
        %s150 = sand.u32 %s25, 1
        %s151 = smul.addr %s150, 16
        %s152 = scalar_lea.vmem [#allocation2], %s151
        %p153 = pneg %p38
        %p154 = pneg %p35
        %p155 = pneg %p64
        %p156 = pneg %p61
        %p157 = scmp.lt.s32.totalorder %s17, 1
        %s158 = scalar_select %p157, %s17, 1
        %s159 = smul.addr %s158, 2
        %s160 = smul.addr %s159, 8
        %s161 = scalar_lea.vmem %s1, %s160
        %p162 = pneg %p90
        %p163 = pneg %p87
        %p164 = scmp.lt.s32.totalorder %s17, 1
        %s165 = scalar_select %p164, %s17, 1
        %s166 = smul.addr %s165, 2
        %s167 = smul.addr %s166, 8
        %s168 = scalar_lea.vmem %s2, %s167
        %p169 = scmp.lt.s32.totalorder %s17, 1
        %s170 = scalar_select %p169, %s17, 1
        %s171 = smul.addr %s170, 2
        %s172 = smul.addr %s171, 8
        %s173 = scalar_lea.vmem %s1, %s172
        %p174 = scmp.lt.s32.totalorder %s17, 1
        %s175 = scalar_select %p174, %s17, 1
        %s176 = smul.addr %s175, 2
        %s177 = smul.addr %s176, 8
        %s178 = scalar_lea.vmem %s2, %s177
        %v179 = vld [vmem:[%s142] sm:$0xff]
        %v180 = vld [vmem:[%s142 + $0x8] sm:$0xff]
        %v181 = vrot.slane %v179, 1
        %v182 = vrot.slane %v180, 1
        %v183 = vlaneseq
        %v184 = vshrl.u32 %v183, 7
        %vm185 = vcmp.lt.s32.totalorder %v184, 7
        %v186 = vsel %vm185, %v181, %v182
        %v187 = vsel %vm185, %v182, %v181
        %v188 = vrot.slane %v179, 2
        %v189 = vrot.slane %v180, 2
        %vm190 = vcmp.lt.s32.totalorder %v184, 6
        %v191 = vsel %vm190, %v188, %v189
        %v192 = vsel %vm190, %v189, %v188
        %v193 = vadd.f32 %v186, %v186
        %v194 = vadd.f32 %v187, %v187
        %v195 = vadd.f32 %v179, %v193
        %v196 = vadd.f32 %v180, %v194
        %v197 = vadd.f32 %v195, %v191
        %v198 = vadd.f32 %v196, %v192
        %v199 = vsub.f32 %v191, %v179
        %v200 = vsub.f32 %v192, %v180
        %201 = vrot.lane.b32.xlu0 %v197, 126
        %v202 = vpop.permute.xlu0 %201
        %203 = vrot.lane.b32.xlu0 %v198, 126
        %v204 = vpop.permute.xlu0 %203
        %v205 = vsub.f32 %v202, %v197
        %v206 = vsub.f32 %v204, %v198
        %207 = vrot.lane.b32.xlu0 %v199, 127
        %v208 = vpop.permute.xlu0 %207
        %209 = vrot.lane.b32.xlu0 %v200, 127
        %v210 = vpop.permute.xlu0 %209
        %211 = vrot.lane.b32.xlu0 %v199, 126
        %v212 = vpop.permute.xlu0 %211
        %213 = vrot.lane.b32.xlu0 %v200, 126
        %v214 = vpop.permute.xlu0 %213
        %v215 = vadd.f32 %v208, %v208
        %v216 = vadd.f32 %v210, %v210
        %v217 = vadd.f32 %v199, %v215
        %v218 = vadd.f32 %v200, %v216
        %v219 = vadd.f32 %v217, %v212
        %v220 = vadd.f32 %v218, %v214
        %vm221 = vcmask 1031168
        %222 = vst.msk [vmem:[%s173] sm:$0xff] %vm221, %v205
        %vm223 = vcmask 1029120
        %224 = vst.msk [vmem:[%s173 + $0x8] sm:$0x3f] %vm223, %v206
        %225 = vst.msk [vmem:[%s178] sm:$0xff] %vm221, %v219
        %226 = vst.msk [vmem:[%s178 + $0x8] sm:$0x3f] %vm223, %v220
        %p227 = scmp.lt.s32.totalorder %s17, 1
        %s228 = scalar_select %p227, %s17, 1
        %s229 = smul.addr %s228, 2
        %s230 = smul.addr %s229, 8
        %s231 = scalar_lea.vmem %s1, %s230
        %p232 = scmp.lt.s32.totalorder %s17, 1
        %s233 = scalar_select %p232, %s17, 1
        %s234 = smul.addr %s233, 2
        %s235 = smul.addr %s234, 8
        %s236 = scalar_lea.vmem %s2, %s235
        // Predicated region
        $region29: #{gradient2d.1} parent=23 // pred_check
          %p237 = pneg %p61
        $region30: #{gradient2d.1} parent=23 // pred_check_branch
          %239 = sbr.rel (%p237) target = $region32
        $region31: #{gradient2d.1} parent=23 // pred_region
          _
        $region32: #{gradient2d.1} parent=23 // pred_fallthru
          _
        // Predicated region
        $region33: #{gradient2d.1} parent=23 // pred_check
          %p240 = pneg %p87
        $region34: #{gradient2d.1} parent=23 // pred_check_branch
          %242 = sbr.rel (%p240) target = $region36
        $region35: #{gradient2d.1} parent=23 // pred_region
          _
        $region36: #{gradient2d.1} parent=23 // pred_fallthru
          _
      $region24: #{gradient2d.1} parent=5 // pred_fallthru
        _
      %p243 = scmp.le.s32.totalorder 2, %s12
      // Predicated region
      $region37: #{gradient2d.1} parent=5 // pred_check
        %p244 = pneg %p243
      $region38: #{gradient2d.1} parent=5 // pred_check_branch
        %246 = sbr.rel (%p244) target = $region40
      $region39: #{gradient2d.1} parent=5 // pred_region
        %s247 = ssub.s32 %s12, 2
        // Predicated region
        $region41: #{gradient2d.1} parent=39 // pred_check
          %p248 = pneg %p67
        $region42: #{gradient2d.1} parent=39 // pred_check_branch
          %250 = sbr.rel (%p248) target = $region44
        $region43: #{gradient2d.1} parent=39 // pred_region
          %p251 = scmp.lt.s32.totalorder %s18, 1
          %s252 = scalar_select %p251, %s18, 1
          %s253 = smul.addr %s252, 2
          %s254 = smul.addr %s253, 8
          %s255 = scalar_lea.vmem %s1, %s254
        $region44: #{gradient2d.1} parent=39 // pred_fallthru
          _
        // Predicated region
        $region45: #{gradient2d.1} parent=39 // pred_check
          %p256 = pneg %p93
        $region46: #{gradient2d.1} parent=39 // pred_check_branch
          %258 = sbr.rel (%p256) target = $region48
        $region47: #{gradient2d.1} parent=39 // pred_region
          %p259 = scmp.lt.s32.totalorder %s18, 1
          %s260 = scalar_select %p259, %s18, 1
          %s261 = smul.addr %s260, 2
          %s262 = smul.addr %s261, 8
          %s263 = scalar_lea.vmem %s2, %s262
        $region48: #{gradient2d.1} parent=39 // pred_fallthru
          _
      $region40: #{gradient2d.1} parent=5 // pred_fallthru
        _
    $region6: #{gradient2d.1} parent=1 // loop_footer
      %s16 = sadd.s32 1, %s12
    $region7: #{gradient2d.1} parent=1 // loop_footer_branch
      %11 = sbr.rel target = $region3
    $region8: #{gradient2d.1} parent=1 // loop_exit
      _
    %264 = vsyncpa [#allocation3], 1
    %s265 = scalar_lea.sflag [#allocation3], 1
    %266 = vsyncpa %s265, 1

</llo_original>
